<compile_context>
chip_gen: v6e
topology: v6e:2x2x1
jax: 0.10.0
libtpu: 0.0.40
codegen_flags: <defaults>
</compile_context>

<pallas_src>
import functools

import jax
import jax.numpy as jnp
from jax.experimental import pallas as pl
from jax.experimental.pallas import tpu as pltpu


def _round_up(x, m):
    return ((x + m - 1) // m) * m


def _tensorcores_per_chip():
    """Best-effort TensorCore count (2 on v7x, 1 on v5e/v6e). Defaults to 1."""
    try:
        info = pltpu.get_tpu_info()
        for name in ("num_cores", "core_count", "tensorcores_per_chip", "num_tensorcores"):
            v = getattr(info, name, None)
            if v:
                return int(v)
    except Exception:
        pass
    return 1


def _make_lift_kernel(layer_dims, row_offs, act_dtype):
    """Fused MLP kernel over one lane-dense batch tile.

    x_ref : (n_input,  tile_m)   batch on the minor (lane) dim, tile_m % 128 == 0
    w_ref : (total_rows, max_in) all layer weights packed row-wise, (out, in) layout
    b_ref : (total_rows, 1)      all biases packed row-wise; broadcasts over lanes
    o_ref : (n_output, tile_m)   lane-dense, unmasked stores
    """
    n_layers = len(layer_dims) - 1

    def kernel(x_ref, w_ref, b_ref, o_ref):
        h = x_ref[...]
        # Static Python unroll: heterogeneous layer shapes + full LLO visibility.
        for li in range(n_layers):
            in_l, out_l = layer_dims[li], layer_dims[li + 1]
            r0 = row_offs[li]
            w = w_ref[r0:r0 + out_l, 0:in_l]          # static slice of packed weights
            b = b_ref[r0:r0 + out_l, :]               # (out_l, 1) broadcasts over lanes
            h = jnp.dot(w, h, preferred_element_type=jnp.float32) + b.astype(jnp.float32)
            if li < n_layers - 1:
                # tanh on act_dtype: bf16 runs the EUP at ~2x on v6e/v7x.
                h = jnp.tanh(h.astype(act_dtype))
        o_ref[...] = h.astype(o_ref.dtype)

    return kernel


def lift_net_forward_t(x_t, params, *, tile_m=1024, compute_dtype=None):
    """Feature-major forward: x_t is (n_input, B); returns (n_output, B).

    Use this entry point from adjacent feature-major ops to avoid the
    batch-major transpose/pad HBM passes entirely.
    params: list of 7 (W, b) pairs, W:(in, out), b:(1, out) (PyTorch semantics).
    compute_dtype: None/float32 (default, v5e-safe) or jnp.bfloat16 (v6e/v7x).
    """
    if compute_dtype is None:
        compute_dtype = jnp.float32

    n_in, B = x_t.shape
    layer_dims = [n_in] + [int(w.shape[1]) for (w, _) in params]
    n_out = layer_dims[-1]
    n_layers = len(params)

    # ---- pack 7 weights / 7 biases into 2 contiguous grid-invariant buffers ----
    row_align = 32                       # sublane-pack aligned for f32/bf16/int8
    row_offs, off = [], 0
    for li in range(n_layers):
        row_offs.append(off)
        off += _round_up(layer_dims[li + 1], row_align)
    total_rows = off
    max_in = max(layer_dims[:-1])

    w_packed = jnp.zeros((total_rows, max_in), dtype=compute_dtype)
    b_packed = jnp.zeros((total_rows, 1), dtype=compute_dtype)
    for li, (w, b) in enumerate(params):
        out_l, in_l = layer_dims[li + 1], layer_dims[li]
        w_packed = w_packed.at[row_offs[li]:row_offs[li] + out_l, :in_l].set(
            jnp.asarray(w).T.astype(compute_dtype))          # (out, in) layout
        b_packed = b_packed.at[row_offs[li]:row_offs[li] + out_l, 0].set(
            jnp.asarray(b).reshape(-1).astype(compute_dtype))
    itemsize = w_packed.dtype.itemsize

    # ---- batch tiling: pad only to lane granularity; tile_m divides Bp exactly ----
    Bp = _round_up(max(B, 1), 128)
    n128 = Bp // 128
    target_d = max(1, min(tile_m // 128, n128))
    if _tensorcores_per_chip() >= 2 and n128 >= 2:
        # Guarantee >= 2 batch tiles so the "parallel" axis shards across both TCs.
        target_d = min(target_d, n128 // 2)
    d = 1
    for cand in range(max(target_d, 1), 0, -1):
        if n128 % cand == 0:
            d = cand
            break
    tile_m = 128 * d
    grid_len = Bp // tile_m

    # Pad/cast the activation stream (single fused copy under jit).
    x_p = jnp.pad(x_t.astype(compute_dtype), ((0, 0), (0, Bp - B)))

    x_spec = pl.BlockSpec((n_in, tile_m), lambda i: (0, i))
    w_spec = pl.BlockSpec(w_packed.shape, lambda i: (0, 0))   # grid-invariant block
    b_spec = pl.BlockSpec(b_packed.shape, lambda i: (0, 0))   # grid-invariant block
    out_spec = pl.BlockSpec((n_out, tile_m), lambda i: (0, i))

    flops = 2 * Bp * sum(layer_dims[i] * layer_dims[i + 1] for i in range(n_layers))
    transcendentals = Bp * sum(layer_dims[i + 1] for i in range(n_layers - 1))
    bytes_accessed = (itemsize * Bp * (n_in + n_out)
                      + itemsize * int(w_packed.size + b_packed.size))
    cost = pl.CostEstimate(flops=flops, transcendentals=transcendentals,
                           bytes_accessed=bytes_accessed)

    kernel = _make_lift_kernel(layer_dims, row_offs, compute_dtype)

    out_p = pl.pallas_call(
        kernel,
        out_shape=jax.ShapeDtypeStruct((n_out, Bp), compute_dtype),
        grid_spec=pltpu.PrefetchScalarGridSpec(
            num_scalar_prefetch=0,
            grid=(grid_len,),
            in_specs=[x_spec, w_spec, b_spec],
            out_specs=out_spec,
        ),
        compiler_params=pltpu.CompilerParams(
            dimension_semantics=("parallel",),   # batch tiles shard across TCs on v7x
        ),
        cost_estimate=cost,
    )(x_p, w_packed, b_packed)

    return out_p[:, :B]


def lift_net_forward(x, params, *, tile_m=1024, compute_dtype=None):
    """Batch-major forward: x (B, n_input) -> (B, n_output).

    Thin layout wrapper around lift_net_forward_t; call it under jit so the
    transpose/pad fuses with the producer/consumer copies.
    """
    out_t = lift_net_forward_t(x.T, params, tile_m=tile_m, compute_dtype=compute_dtype)
    return out_t.T.astype(x.dtype)


def init_lift_net_params(key, n_input, n_hidden, n_output):
    """Deterministic init matching the PyTorch module: W ~ N(0, 0.1), b = 0."""
    dims = [n_input] + [n_hidden] * 6 + [n_output]
    params = []
    for li in range(7):
        key, sub = jax.random.split(key)
        w = 0.1 * jax.random.normal(sub, (dims[li], dims[li + 1]), dtype=jnp.float32)
        b = jnp.zeros((1, dims[li + 1]), dtype=jnp.float32)
        params.append((w, b))
    return params


def lift_net_reference(x, params):
    h = x
    for li, (w, b) in enumerate(params):
        h = h @ w + b
        if li < 6:
            h = jnp.tanh(h)
    return h


if __name__ == "__main__":
    key = jax.random.PRNGKey(0)
    n_input, n_hidden, n_output = 16, 32, 24

    pkey, xkey = jax.random.split(key)
    params = init_lift_net_params(pkey, n_input, n_hidden, n_output)

    fwd_f32 = jax.jit(functools.partial(lift_net_forward, tile_m=1024))

    # 1) small batch, f32 path (reference-tight)
    batch = 16
    x = jax.random.normal(xkey, (batch, n_input), dtype=jnp.float32)
    out = jax.block_until_ready(fwd_f32(x, params))
    ref = lift_net_reference(x, params)
    assert out.shape == (batch, n_output)
    assert jnp.allclose(out, ref, atol=1e-4, rtol=1e-4), "f32 mismatch vs reference"

    # 2) non-multiple-of-128 batch: exercises lane-granular padding + multi-tile grid
    batch2 = 200
    x2 = jax.random.normal(jax.random.PRNGKey(1), (batch2, n_input), dtype=jnp.float32)
    out2 = jax.block_until_ready(fwd_f32(x2, params))
    ref2 = lift_net_reference(x2, params)
    assert out2.shape == (batch2, n_output)
    assert jnp.allclose(out2, ref2, atol=1e-4, rtol=1e-4), "f32 padded-batch mismatch"

    # 3) bf16 weight/activation path (recommended on v6e/v7x), looser tolerance
    fwd_bf16 = jax.jit(functools.partial(lift_net_forward, tile_m=1024,
                                         compute_dtype=jnp.bfloat16))
    out_bf16 = jax.block_until_ready(fwd_bf16(x, params))
    assert out_bf16.shape == (batch, n_output)
    assert jnp.allclose(out_bf16.astype(jnp.float32), ref, atol=5e-2, rtol=5e-2), \
        "bf16 mismatch vs reference"

    print("KERNEL_OK")
</pallas_src>

<mosaic_0001>
module attributes {stable_mosaic.version = 11 : i64} {
  func.func @kernel(%arg0: i32, %arg1: memref<16x128xf32, #tpu.memory_space<vmem>>, %arg2: memref<224x32xf32, #tpu.memory_space<vmem>>, %arg3: memref<224x1xf32, #tpu.memory_space<vmem>>, %arg4: memref<24x128xf32, #tpu.memory_space<vmem>>) attributes {dimension_semantics = [#tpu.dimension_semantics<parallel>], iteration_bounds = array<i64: 1>, scalar_prefetch = 0 : i64, scratch_operands = 0 : i64, tpu.core_type = #tpu.core_type<tc>, window_params = [{transform_indices = @transform_0, window_bounds = array<i64: 16, 128>}, {pipeline_mode = #tpu.pipeline_mode<synchronous>, transform_indices = @transform_1, window_bounds = array<i64: 224, 32>}, {pipeline_mode = #tpu.pipeline_mode<synchronous>, transform_indices = @transform_2, window_bounds = array<i64: 224, 1>}, {transform_indices = @transform_3, window_bounds = array<i64: 24, 128>}]} {
    %c0 = arith.constant 0 : index
    %c0_0 = arith.constant 0 : index
    %0 = vector.load %arg1[%c0, %c0_0] : memref<16x128xf32, #tpu.memory_space<vmem>>, vector<16x128xf32>
    %c0_1 = arith.constant 0 : index
    %c0_2 = arith.constant 0 : index
    %1 = vector.load %arg2[%c0_1, %c0_2] : memref<224x32xf32, #tpu.memory_space<vmem>>, vector<32x16xf32>
    %c0_3 = arith.constant 0 : index
    %c0_4 = arith.constant 0 : index
    %2 = vector.load %arg3[%c0_3, %c0_4] : memref<224x1xf32, #tpu.memory_space<vmem>>, vector<32x1xf32>
    %cst = arith.constant dense<0.000000e+00> : vector<32x128xf32>
    %3 = tpu.matmul %1, %0, %cst {dimension_numbers = #tpu.dot_dimension_numbers<[1], [0], [0], [1], [0, 0, 1, 1], [], []>} : vector<32x16xf32>, vector<16x128xf32>, vector<32x128xf32> -> vector<32x128xf32>
    %4 = vector.broadcast %2 : vector<32x1xf32> to vector<32x128xf32>
    %5 = arith.addf %3, %4 : vector<32x128xf32>
    %6 = math.tanh %5 : vector<32x128xf32>
    %c32 = arith.constant 32 : index
    %c0_5 = arith.constant 0 : index
    %7 = vector.load %arg2[%c32, %c0_5] : memref<224x32xf32, #tpu.memory_space<vmem>>, vector<32x32xf32>
    %c32_6 = arith.constant 32 : index
    %c0_7 = arith.constant 0 : index
    %8 = vector.load %arg3[%c32_6, %c0_7] : memref<224x1xf32, #tpu.memory_space<vmem>>, vector<32x1xf32>
    %cst_8 = arith.constant dense<0.000000e+00> : vector<32x128xf32>
    %9 = tpu.matmul %7, %6, %cst_8 {dimension_numbers = #tpu.dot_dimension_numbers<[1], [0], [0], [1], [0, 0, 1, 1], [], []>} : vector<32x32xf32>, vector<32x128xf32>, vector<32x128xf32> -> vector<32x128xf32>
    %10 = vector.broadcast %8 : vector<32x1xf32> to vector<32x128xf32>
    %11 = arith.addf %9, %10 : vector<32x128xf32>
    %12 = math.tanh %11 : vector<32x128xf32>
    %c64 = arith.constant 64 : index
    %c0_9 = arith.constant 0 : index
    %13 = vector.load %arg2[%c64, %c0_9] : memref<224x32xf32, #tpu.memory_space<vmem>>, vector<32x32xf32>
    %c64_10 = arith.constant 64 : index
    %c0_11 = arith.constant 0 : index
    %14 = vector.load %arg3[%c64_10, %c0_11] : memref<224x1xf32, #tpu.memory_space<vmem>>, vector<32x1xf32>
    %cst_12 = arith.constant dense<0.000000e+00> : vector<32x128xf32>
    %15 = tpu.matmul %13, %12, %cst_12 {dimension_numbers = #tpu.dot_dimension_numbers<[1], [0], [0], [1], [0, 0, 1, 1], [], []>} : vector<32x32xf32>, vector<32x128xf32>, vector<32x128xf32> -> vector<32x128xf32>
    %16 = vector.broadcast %14 : vector<32x1xf32> to vector<32x128xf32>
    %17 = arith.addf %15, %16 : vector<32x128xf32>
    %18 = math.tanh %17 : vector<32x128xf32>
    %c96 = arith.constant 96 : index
    %c0_13 = arith.constant 0 : index
    %19 = vector.load %arg2[%c96, %c0_13] : memref<224x32xf32, #tpu.memory_space<vmem>>, vector<32x32xf32>
    %c96_14 = arith.constant 96 : index
    %c0_15 = arith.constant 0 : index
    %20 = vector.load %arg3[%c96_14, %c0_15] : memref<224x1xf32, #tpu.memory_space<vmem>>, vector<32x1xf32>
    %cst_16 = arith.constant dense<0.000000e+00> : vector<32x128xf32>
    %21 = tpu.matmul %19, %18, %cst_16 {dimension_numbers = #tpu.dot_dimension_numbers<[1], [0], [0], [1], [0, 0, 1, 1], [], []>} : vector<32x32xf32>, vector<32x128xf32>, vector<32x128xf32> -> vector<32x128xf32>
    %22 = vector.broadcast %20 : vector<32x1xf32> to vector<32x128xf32>
    %23 = arith.addf %21, %22 : vector<32x128xf32>
    %24 = math.tanh %23 : vector<32x128xf32>
    %c128 = arith.constant 128 : index
    %c0_17 = arith.constant 0 : index
    %25 = vector.load %arg2[%c128, %c0_17] : memref<224x32xf32, #tpu.memory_space<vmem>>, vector<32x32xf32>
    %c128_18 = arith.constant 128 : index
    %c0_19 = arith.constant 0 : index
    %26 = vector.load %arg3[%c128_18, %c0_19] : memref<224x1xf32, #tpu.memory_space<vmem>>, vector<32x1xf32>
    %cst_20 = arith.constant dense<0.000000e+00> : vector<32x128xf32>
    %27 = tpu.matmul %25, %24, %cst_20 {dimension_numbers = #tpu.dot_dimension_numbers<[1], [0], [0], [1], [0, 0, 1, 1], [], []>} : vector<32x32xf32>, vector<32x128xf32>, vector<32x128xf32> -> vector<32x128xf32>
    %28 = vector.broadcast %26 : vector<32x1xf32> to vector<32x128xf32>
    %29 = arith.addf %27, %28 : vector<32x128xf32>
    %30 = math.tanh %29 : vector<32x128xf32>
    %c160 = arith.constant 160 : index
    %c0_21 = arith.constant 0 : index
    %31 = vector.load %arg2[%c160, %c0_21] : memref<224x32xf32, #tpu.memory_space<vmem>>, vector<32x32xf32>
    %c160_22 = arith.constant 160 : index
    %c0_23 = arith.constant 0 : index
    %32 = vector.load %arg3[%c160_22, %c0_23] : memref<224x1xf32, #tpu.memory_space<vmem>>, vector<32x1xf32>
    %cst_24 = arith.constant dense<0.000000e+00> : vector<32x128xf32>
    %33 = tpu.matmul %31, %30, %cst_24 {dimension_numbers = #tpu.dot_dimension_numbers<[1], [0], [0], [1], [0, 0, 1, 1], [], []>} : vector<32x32xf32>, vector<32x128xf32>, vector<32x128xf32> -> vector<32x128xf32>
    %34 = vector.broadcast %32 : vector<32x1xf32> to vector<32x128xf32>
    %35 = arith.addf %33, %34 : vector<32x128xf32>
    %36 = math.tanh %35 : vector<32x128xf32>
    %c192 = arith.constant 192 : index
    %c0_25 = arith.constant 0 : index
    %37 = vector.load %arg2[%c192, %c0_25] : memref<224x32xf32, #tpu.memory_space<vmem>>, vector<24x32xf32>
    %c192_26 = arith.constant 192 : index
    %c0_27 = arith.constant 0 : index
    %38 = vector.load %arg3[%c192_26, %c0_27] : memref<224x1xf32, #tpu.memory_space<vmem>>, vector<24x1xf32>
    %cst_28 = arith.constant dense<0.000000e+00> : vector<24x128xf32>
    %39 = tpu.matmul %37, %36, %cst_28 {dimension_numbers = #tpu.dot_dimension_numbers<[1], [0], [0], [1], [0, 0, 1, 1], [], []>} : vector<24x32xf32>, vector<32x128xf32>, vector<24x128xf32> -> vector<24x128xf32>
    %40 = vector.broadcast %38 : vector<24x1xf32> to vector<24x128xf32>
    %41 = arith.addf %39, %40 : vector<24x128xf32>
    %c0_29 = arith.constant 0 : index
    %c0_30 = arith.constant 0 : index
    %42 = vector.load %arg4[%c0_29, %c0_30] : memref<24x128xf32, #tpu.memory_space<vmem>>, vector<24x128xf32>
    tpu.vector_store %arg4[%c0_29, %c0_30], %41 {strides = array<i32>} : memref<24x128xf32, #tpu.memory_space<vmem>>, vector<24x128xf32>,
    return
  }
  func.func @transform_0(%arg0: i32) -> (i32, i32) {
    %c0_i32 = arith.constant 0 : i32
    %c0_i32_0 = arith.constant 0 : i32
    return %c0_i32, %arg0 : i32, i32
  }
  func.func @transform_1(%arg0: i32) -> (i32, i32) {
    %c0_i32 = arith.constant 0 : i32
    %c0_i32_0 = arith.constant 0 : i32
    %c0_i32_1 = arith.constant 0 : i32
    return %c0_i32, %c0_i32_0 : i32, i32
  }
  func.func @transform_2(%arg0: i32) -> (i32, i32) {
    %c0_i32 = arith.constant 0 : i32
    %c0_i32_0 = arith.constant 0 : i32
    %c0_i32_1 = arith.constant 0 : i32
    return %c0_i32, %c0_i32_0 : i32, i32
  }
  func.func @transform_3(%arg0: i32) -> (i32, i32) {
    %c0_i32 = arith.constant 0 : i32
    %c0_i32_0 = arith.constant 0 : i32
    return %c0_i32, %arg0 : i32, i32
  }
}

</mosaic_0001>

<llo_original>
// kernel: lift_net_forward.1
$region0: #{lift_net_forward.1}
  #allocation0 [shape = 'u32[]', space=smem, size = 0x4, offset = 0x4, fixed_abs, tag = 'smem constant byte address 0x4 - core index']
  #allocation1 [shape = 'u32[144,128]{1,0:T(1,128)}', space=vmem, size = 0x12000, scoped, tag = 'internal scratch']
  %s0 = inlined_call_operand.vmem [shape: f32[16,128], index: 0, kind: input, shape index: {}]
  %s1 = inlined_call_operand.vmem [shape: f32[224,32], index: 1, kind: input, shape index: {}]
  %s2 = inlined_call_operand.vmem [shape: f32[224,1], index: 2, kind: input, shape index: {}]
  %s3 = inlined_call_operand.vmem [shape: f32[24,128], index: 3, kind: output, shape index: {}]
  %s4 = sld [smem:[#allocation0]]
  $region22: #{lift_net_forward.1} parent=0
    _
  %s6 = ssub.s32 1, %s4
  %s7 = scalar_select 0, %s6, %s4
  // Predicated region
  $region2: #{lift_net_forward.1} parent=0 // pred_check
    _
  $region3: #{lift_net_forward.1} parent=0 // pred_check_branch
    %9 = sbr.rel (0) target = $region5
  $region4: #{lift_net_forward.1} parent=0 // pred_region
    _
  $region5: #{lift_net_forward.1} parent=0 // pred_fallthru
    _
  // Predicated region
  $region6: #{lift_net_forward.1} parent=0 // pred_check
    _
  $region7: #{lift_net_forward.1} parent=0 // pred_check_branch
    %11 = sbr.rel (0) target = $region9
  $region8: #{lift_net_forward.1} parent=0 // pred_region
    _
  $region9: #{lift_net_forward.1} parent=0 // pred_fallthru
    _
  // Predicated region
  $region10: #{lift_net_forward.1} parent=0 // pred_check
    _
  $region11: #{lift_net_forward.1} parent=0 // pred_check_branch
    %13 = sbr.rel (0) target = $region13
  $region12: #{lift_net_forward.1} parent=0 // pred_region
    _
  $region13: #{lift_net_forward.1} parent=0 // pred_fallthru
    _
  %v14 = vld [vmem:[%s0] sm:$0xff]
  %v15 = vld [vmem:[%s0 + $0x8] sm:$0xff]
  %v16 = vld [vmem:[%s1] sm:$0xff]
  %v17 = vld [vmem:[%s1 + $0x8] sm:$0xff]
  %v18 = vld [vmem:[%s1 + $0x10] sm:$0xff]
  %v19 = vld [vmem:[%s1 + $0x18] sm:$0xff]
  %v20 = vld [vmem:[%s2] sm:$0xff]
  %v21 = vld [vmem:[%s2 + $0x8] sm:$0xff]
  %v22 = vld [vmem:[%s2 + $0x10] sm:$0xff]
  %v23 = vld [vmem:[%s2 + $0x18] sm:$0xff]
  %25 = vset.pattern.permute.xlu0 0
  %26 = vperm.xlu0 %25, %v20
  %v27 = vpop.permute.xlu0 %26
  %30 = vset.pattern.permute.xlu0 0
  %31 = vperm.xlu0 %30, %v21
  %v32 = vpop.permute.xlu0 %31
  %35 = vset.pattern.permute.xlu0 0
  %36 = vperm.xlu0 %35, %v22
  %v37 = vpop.permute.xlu0 %36
  %40 = vset.pattern.permute.xlu0 0
  %41 = vperm.xlu0 %40, %v23
  %v42 = vpop.permute.xlu0 %41
  %vm44 = vcmask 130048
  %v46 = vsel %vm44, %v16, 0
  %v49 = vsel %vm44, %v17, 0
  %v52 = vsel %vm44, %v18, 0
  %v55 = vsel %vm44, %v19, 0
  %57 = vmatprep.subr.mxu0 0.0
  %58 = vmatpush1.msra.mxu0 0.0
  %59 = vmatprep.subr.mxu0 0.0
  %60 = vmatpush1.msra.mxu0 0.0
  %61 = vmatprep.subr.mxu0 0.0
  %62 = vmatpush1.msra.mxu0 0.0
  %63 = vmatprep.subr.mxu0 0.0
  %64 = vmatpush1.msra.mxu0 0.0
  %65 = vmatprep.subr.mxu0 0.0
  %66 = vmatpush1.msra.mxu0 0.0
  %67 = vmatprep.subr.mxu0 0.0
  %68 = vmatpush1.msra.mxu0 0.0
  %69 = vmatprep.subr.mxu0 0.0
  %70 = vmatpush1.msra.mxu0 0.0
  %71 = vmatprep.subr.mxu0 0.0
  %72 = vmatpush1.msra.mxu0 0.0
  %73 = vmatprep.subr.mxu0 0.0
  %74 = vmatpush1.msra.mxu0 0.0
  %75 = vmatprep.subr.mxu0 0.0
  %76 = vmatpush1.msra.mxu0 0.0
  %77 = vmatprep.subr.mxu0 0.0
  %78 = vmatpush1.msra.mxu0 0.0
  %79 = vmatprep.subr.mxu0 0.0
  %80 = vmatpush1.msra.mxu0 0.0
  %81 = vmatprep.subr.mxu0 0.0
  %82 = vmatpush1.msra.mxu0 0.0
  %83 = vmatprep.subr.mxu0 0.0
  %84 = vmatpush1.msra.mxu0 0.0
  %85 = vmatprep.subr.mxu0 0.0
  %86 = vmatpush1.msra.mxu0 %v15
  %87 = vmatprep.subr.mxu0 0.0
  %88 = vmatpush1.msra.mxu0 %v14
  %89 = vmatprep.subr.mxu0 0.0
  %90 = vmatpush2.msra.mxu0 0.0
  %91 = vmatprep.subr.mxu0 0.0
  %92 = vmatpush2.msra.mxu0 0.0
  %93 = vmatprep.subr.mxu0 0.0
  %94 = vmatpush2.msra.mxu0 0.0
  %95 = vmatprep.subr.mxu0 0.0
  %96 = vmatpush2.msra.mxu0 0.0
  %97 = vmatprep.subr.mxu0 0.0
  %98 = vmatpush2.msra.mxu0 0.0
  %99 = vmatprep.subr.mxu0 0.0
  %100 = vmatpush2.msra.mxu0 0.0
  %101 = vmatprep.subr.mxu0 0.0
  %102 = vmatpush2.msra.mxu0 0.0
  %103 = vmatprep.subr.mxu0 0.0
  %104 = vmatpush2.msra.mxu0 0.0
  %105 = vmatprep.subr.mxu0 0.0
  %106 = vmatpush2.msra.mxu0 0.0
  %107 = vmatprep.subr.mxu0 0.0
  %108 = vmatpush2.msra.mxu0 0.0
  %109 = vmatprep.subr.mxu0 0.0
  %110 = vmatpush2.msra.mxu0 0.0
  %111 = vmatprep.subr.mxu0 0.0
  %112 = vmatpush2.msra.mxu0 0.0
  %113 = vmatprep.subr.mxu0 0.0
  %114 = vmatpush2.msra.mxu0 0.0
  %115 = vmatprep.subr.mxu0 0.0
  %116 = vmatpush2.msra.mxu0 0.0
  %117 = vmatprep.subr.mxu0 0.0
  %118 = vmatpush2.msra.mxu0 0.0
  %119 = vmatprep.subr.mxu0 0.0
  %120 = vmatpush2.msra.mxu0 0.0
  %121 = vmatprep.mubr.f32.mxu0 0.0
  %122 = vmatmul.mubr.f32.gmra.mxu0 %v46
  %v123 = vpop.f32.mrf.mxu0
  %v124 = vadd.f32 %v27, %v123
  %v125 = vpop.f32.mrf.mxu0
  %126 = vmatprep.mubr.f32.mxu0 0.0
  %127 = vmatmul.mubr.f32.gmra.mxu0 %v49
  %v128 = vpop.f32.mrf.mxu0
  %v129 = vadd.f32 %v32, %v128
  %v130 = vpop.f32.mrf.mxu0
  %131 = vmatprep.mubr.f32.mxu0 0.0
  %132 = vmatmul.mubr.f32.gmra.mxu0 %v52
  %v133 = vpop.f32.mrf.mxu0
  %v134 = vadd.f32 %v37, %v133
  %v135 = vpop.f32.mrf.mxu0
  %136 = vmatprep.mubr.f32.mxu0 0.0
  %137 = vmatmul.mubr.f32.gmra.mxu0 %v55
  %v138 = vpop.f32.mrf.mxu0
  %v139 = vadd.f32 %v42, %v138
  %v140 = vpop.f32.mrf.mxu0
  %141 = vdwg.mxu0
  %v142 = vtanh.pop %v124
  %v143 = vtanh.pop %v129
  %v144 = vtanh.pop %v134
  %v145 = vtanh.pop %v139
  %v146 = vld [vmem:[%s1 + $0x20] sm:$0xff]
  %v147 = vld [vmem:[%s1 + $0x28] sm:$0xff]
  %v148 = vld [vmem:[%s1 + $0x30] sm:$0xff]
  %v149 = vld [vmem:[%s1 + $0x38] sm:$0xff]
  %v150 = vld [vmem:[%s2 + $0x20] sm:$0xff]
  %v151 = vld [vmem:[%s2 + $0x28] sm:$0xff]
  %v152 = vld [vmem:[%s2 + $0x30] sm:$0xff]
  %v153 = vld [vmem:[%s2 + $0x38] sm:$0xff]
  %155 = vset.pattern.permute.xlu0 0
  %156 = vperm.xlu0 %155, %v150
  %v157 = vpop.permute.xlu0 %156
  %160 = vset.pattern.permute.xlu0 0
  %161 = vperm.xlu0 %160, %v151
  %v162 = vpop.permute.xlu0 %161
  %165 = vset.pattern.permute.xlu0 0
  %166 = vperm.xlu0 %165, %v152
  %v167 = vpop.permute.xlu0 %166
  %170 = vset.pattern.permute.xlu0 0
  %171 = vperm.xlu0 %170, %v153
  %v172 = vpop.permute.xlu0 %171
  %vm174 = vcmask 261120
  %v176 = vsel %vm174, %v146, 0
  %v179 = vsel %vm174, %v147, 0
  %v182 = vsel %vm174, %v148, 0
  %v185 = vsel %vm174, %v149, 0
  %187 = vmatprep.subr.mxu0 0.0
  %188 = vmatpush1.msra.mxu0 0.0
  %189 = vmatprep.subr.mxu0 0.0
  %190 = vmatpush1.msra.mxu0 0.0
  %191 = vmatprep.subr.mxu0 0.0
  %192 = vmatpush1.msra.mxu0 0.0
  %193 = vmatprep.subr.mxu0 0.0
  %194 = vmatpush1.msra.mxu0 0.0
  %195 = vmatprep.subr.mxu0 0.0
  %196 = vmatpush1.msra.mxu0 0.0
  %197 = vmatprep.subr.mxu0 0.0
  %198 = vmatpush1.msra.mxu0 0.0
  %199 = vmatprep.subr.mxu0 0.0
  %200 = vmatpush1.msra.mxu0 0.0
  %201 = vmatprep.subr.mxu0 0.0
  %202 = vmatpush1.msra.mxu0 0.0
  %203 = vmatprep.subr.mxu0 0.0
  %204 = vmatpush1.msra.mxu0 0.0
  %205 = vmatprep.subr.mxu0 0.0
  %206 = vmatpush1.msra.mxu0 0.0
  %207 = vmatprep.subr.mxu0 0.0
  %208 = vmatpush1.msra.mxu0 0.0
  %209 = vmatprep.subr.mxu0 0.0
  %210 = vmatpush1.msra.mxu0 0.0
  %211 = vmatprep.subr.mxu0 0.0
  %212 = vmatpush1.msra.mxu0 %v145
  %213 = vmatprep.subr.mxu0 0.0
  %214 = vmatpush1.msra.mxu0 %v144
  %215 = vmatprep.subr.mxu0 0.0
  %216 = vmatpush1.msra.mxu0 %v143
  %217 = vmatprep.subr.mxu0 0.0
  %218 = vmatpush1.msra.mxu0 %v142
  %219 = vmatprep.subr.mxu0 0.0
  %220 = vmatpush2.msra.mxu0 0.0
  %221 = vmatprep.subr.mxu0 0.0
  %222 = vmatpush2.msra.mxu0 0.0
  %223 = vmatprep.subr.mxu0 0.0
  %224 = vmatpush2.msra.mxu0 0.0
  %225 = vmatprep.subr.mxu0 0.0
  %226 = vmatpush2.msra.mxu0 0.0
  %227 = vmatprep.subr.mxu0 0.0
  %228 = vmatpush2.msra.mxu0 0.0
  %229 = vmatprep.subr.mxu0 0.0
  %230 = vmatpush2.msra.mxu0 0.0
  %231 = vmatprep.subr.mxu0 0.0
  %232 = vmatpush2.msra.mxu0 0.0
  %233 = vmatprep.subr.mxu0 0.0
  %234 = vmatpush2.msra.mxu0 0.0
  %235 = vmatprep.subr.mxu0 0.0
  %236 = vmatpush2.msra.mxu0 0.0
  %237 = vmatprep.subr.mxu0 0.0
  %238 = vmatpush2.msra.mxu0 0.0
  %239 = vmatprep.subr.mxu0 0.0
  %240 = vmatpush2.msra.mxu0 0.0
  %241 = vmatprep.subr.mxu0 0.0
  %242 = vmatpush2.msra.mxu0 0.0
  %243 = vmatprep.subr.mxu0 0.0
  %244 = vmatpush2.msra.mxu0 0.0
  %245 = vmatprep.subr.mxu0 0.0
  %246 = vmatpush2.msra.mxu0 0.0
  %247 = vmatprep.subr.mxu0 0.0
  %248 = vmatpush2.msra.mxu0 0.0
  %249 = vmatprep.subr.mxu0 0.0
  %250 = vmatpush2.msra.mxu0 0.0
  %251 = vmatprep.mubr.f32.mxu0 0.0
  %252 = vmatmul.mubr.f32.gmra.mxu0 %v176
  %v253 = vpop.f32.mrf.mxu0
  %v254 = vadd.f32 %v157, %v253
  %v255 = vpop.f32.mrf.mxu0
  %256 = vmatprep.mubr.f32.mxu0 0.0
  %257 = vmatmul.mubr.f32.gmra.mxu0 %v179
  %v258 = vpop.f32.mrf.mxu0
  %v259 = vadd.f32 %v162, %v258
  %v260 = vpop.f32.mrf.mxu0
  %261 = vmatprep.mubr.f32.mxu0 0.0
  %262 = vmatmul.mubr.f32.gmra.mxu0 %v182
  %v263 = vpop.f32.mrf.mxu0
  %v264 = vadd.f32 %v167, %v263
  %v265 = vpop.f32.mrf.mxu0
  %266 = vmatprep.mubr.f32.mxu0 0.0
  %267 = vmatmul.mubr.f32.gmra.mxu0 %v185
  %v268 = vpop.f32.mrf.mxu0
  %v269 = vadd.f32 %v172, %v268
  %v270 = vpop.f32.mrf.mxu0
  %271 = vdwg.mxu0
  %v272 = vtanh.pop %v254
  %v273 = vtanh.pop %v259
  %v274 = vtanh.pop %v264
  %v275 = vtanh.pop %v269
  %v276 = vld [vmem:[%s1 + $0x40] sm:$0xff]
  %v277 = vld [vmem:[%s1 + $0x48] sm:$0xff]
  %v278 = vld [vmem:[%s1 + $0x50] sm:$0xff]
  %v279 = vld [vmem:[%s1 + $0x58] sm:$0xff]
  %v280 = vld [vmem:[%s2 + $0x40] sm:$0xff]
  %v281 = vld [vmem:[%s2 + $0x48] sm:$0xff]
  %v282 = vld [vmem:[%s2 + $0x50] sm:$0xff]
  %v283 = vld [vmem:[%s2 + $0x58] sm:$0xff]
  %285 = vset.pattern.permute.xlu0 0
  %286 = vperm.xlu0 %285, %v280
  %v287 = vpop.permute.xlu0 %286
  %290 = vset.pattern.permute.xlu0 0
  %291 = vperm.xlu0 %290, %v281
  %v292 = vpop.permute.xlu0 %291
  %295 = vset.pattern.permute.xlu0 0
  %296 = vperm.xlu0 %295, %v282
  %v297 = vpop.permute.xlu0 %296
  %300 = vset.pattern.permute.xlu0 0
  %301 = vperm.xlu0 %300, %v283
  %v302 = vpop.permute.xlu0 %301
  %v305 = vsel %vm174, %v276, 0
  %v308 = vsel %vm174, %v277, 0
  %v311 = vsel %vm174, %v278, 0
  %v314 = vsel %vm174, %v279, 0
  %316 = vmatprep.subr.mxu0 0.0
  %317 = vmatpush1.msra.mxu0 0.0
  %318 = vmatprep.subr.mxu0 0.0
  %319 = vmatpush1.msra.mxu0 0.0
  %320 = vmatprep.subr.mxu0 0.0
  %321 = vmatpush1.msra.mxu0 0.0
  %322 = vmatprep.subr.mxu0 0.0
  %323 = vmatpush1.msra.mxu0 0.0
  %324 = vmatprep.subr.mxu0 0.0
  %325 = vmatpush1.msra.mxu0 0.0
  %326 = vmatprep.subr.mxu0 0.0
  %327 = vmatpush1.msra.mxu0 0.0
  %328 = vmatprep.subr.mxu0 0.0
  %329 = vmatpush1.msra.mxu0 0.0
  %330 = vmatprep.subr.mxu0 0.0
  %331 = vmatpush1.msra.mxu0 0.0
  %332 = vmatprep.subr.mxu0 0.0
  %333 = vmatpush1.msra.mxu0 0.0
  %334 = vmatprep.subr.mxu0 0.0
  %335 = vmatpush1.msra.mxu0 0.0
  %336 = vmatprep.subr.mxu0 0.0
  %337 = vmatpush1.msra.mxu0 0.0
  %338 = vmatprep.subr.mxu0 0.0
  %339 = vmatpush1.msra.mxu0 0.0
  %340 = vmatprep.subr.mxu0 0.0
  %341 = vmatpush1.msra.mxu0 %v275
  %342 = vmatprep.subr.mxu0 0.0
  %343 = vmatpush1.msra.mxu0 %v274
  %344 = vmatprep.subr.mxu0 0.0
  %345 = vmatpush1.msra.mxu0 %v273
  %346 = vmatprep.subr.mxu0 0.0
  %347 = vmatpush1.msra.mxu0 %v272
  %348 = vmatprep.subr.mxu0 0.0
  %349 = vmatpush2.msra.mxu0 0.0
  %350 = vmatprep.subr.mxu0 0.0
  %351 = vmatpush2.msra.mxu0 0.0
  %352 = vmatprep.subr.mxu0 0.0
  %353 = vmatpush2.msra.mxu0 0.0
  %354 = vmatprep.subr.mxu0 0.0
  %355 = vmatpush2.msra.mxu0 0.0
  %356 = vmatprep.subr.mxu0 0.0
  %357 = vmatpush2.msra.mxu0 0.0
  %358 = vmatprep.subr.mxu0 0.0
  %359 = vmatpush2.msra.mxu0 0.0
  %360 = vmatprep.subr.mxu0 0.0
  %361 = vmatpush2.msra.mxu0 0.0
  %362 = vmatprep.subr.mxu0 0.0
  %363 = vmatpush2.msra.mxu0 0.0
  %364 = vmatprep.subr.mxu0 0.0
  %365 = vmatpush2.msra.mxu0 0.0
  %366 = vmatprep.subr.mxu0 0.0
  %367 = vmatpush2.msra.mxu0 0.0
  %368 = vmatprep.subr.mxu0 0.0
  %369 = vmatpush2.msra.mxu0 0.0
  %370 = vmatprep.subr.mxu0 0.0
  %371 = vmatpush2.msra.mxu0 0.0
  %372 = vmatprep.subr.mxu0 0.0
  %373 = vmatpush2.msra.mxu0 0.0
  %374 = vmatprep.subr.mxu0 0.0
  %375 = vmatpush2.msra.mxu0 0.0
  %376 = vmatprep.subr.mxu0 0.0
  %377 = vmatpush2.msra.mxu0 0.0
  %378 = vmatprep.subr.mxu0 0.0
  %379 = vmatpush2.msra.mxu0 0.0
  %380 = vmatprep.mubr.f32.mxu0 0.0
  %381 = vmatmul.mubr.f32.gmra.mxu0 %v305
  %v382 = vpop.f32.mrf.mxu0
  %v383 = vadd.f32 %v287, %v382
  %v384 = vpop.f32.mrf.mxu0
  %385 = vmatprep.mubr.f32.mxu0 0.0
  %386 = vmatmul.mubr.f32.gmra.mxu0 %v308
  %v387 = vpop.f32.mrf.mxu0
  %v388 = vadd.f32 %v292, %v387
  %v389 = vpop.f32.mrf.mxu0
  %390 = vmatprep.mubr.f32.mxu0 0.0
  %391 = vmatmul.mubr.f32.gmra.mxu0 %v311
  %v392 = vpop.f32.mrf.mxu0
  %v393 = vadd.f32 %v297, %v392
  %v394 = vpop.f32.mrf.mxu0
  %395 = vmatprep.mubr.f32.mxu0 0.0
  %396 = vmatmul.mubr.f32.gmra.mxu0 %v314
  %v397 = vpop.f32.mrf.mxu0
  %v398 = vadd.f32 %v302, %v397
  %v399 = vpop.f32.mrf.mxu0
  %400 = vdwg.mxu0
  %v401 = vtanh.pop %v383
  %v402 = vtanh.pop %v388
  %v403 = vtanh.pop %v393
  %v404 = vtanh.pop %v398
  %v405 = vld [vmem:[%s1 + $0x60] sm:$0xff]
  %v406 = vld [vmem:[%s1 + $0x68] sm:$0xff]
  %v407 = vld [vmem:[%s1 + $0x70] sm:$0xff]
  %v408 = vld [vmem:[%s1 + $0x78] sm:$0xff]
  %v409 = vld [vmem:[%s2 + $0x60] sm:$0xff]
  %v410 = vld [vmem:[%s2 + $0x68] sm:$0xff]
  %v411 = vld [vmem:[%s2 + $0x70] sm:$0xff]
  %v412 = vld [vmem:[%s2 + $0x78] sm:$0xff]
  %414 = vset.pattern.permute.xlu0 0
  %415 = vperm.xlu0 %414, %v409
  %v416 = vpop.permute.xlu0 %415
  %419 = vset.pattern.permute.xlu0 0
  %420 = vperm.xlu0 %419, %v410
  %v421 = vpop.permute.xlu0 %420
  %424 = vset.pattern.permute.xlu0 0
  %425 = vperm.xlu0 %424, %v411
  %v426 = vpop.permute.xlu0 %425
  %429 = vset.pattern.permute.xlu0 0
  %430 = vperm.xlu0 %429, %v412
  %v431 = vpop.permute.xlu0 %430
  %v434 = vsel %vm174, %v405, 0
  %v437 = vsel %vm174, %v406, 0
  %v440 = vsel %vm174, %v407, 0
  %v443 = vsel %vm174, %v408, 0
  %445 = vmatprep.subr.mxu0 0.0
  %446 = vmatpush1.msra.mxu0 0.0
  %447 = vmatprep.subr.mxu0 0.0
  %448 = vmatpush1.msra.mxu0 0.0
  %449 = vmatprep.subr.mxu0 0.0
  %450 = vmatpush1.msra.mxu0 0.0
  %451 = vmatprep.subr.mxu0 0.0
  %452 = vmatpush1.msra.mxu0 0.0
  %453 = vmatprep.subr.mxu0 0.0
  %454 = vmatpush1.msra.mxu0 0.0
  %455 = vmatprep.subr.mxu0 0.0
  %456 = vmatpush1.msra.mxu0 0.0
  %457 = vmatprep.subr.mxu0 0.0
  %458 = vmatpush1.msra.mxu0 0.0
  %459 = vmatprep.subr.mxu0 0.0
  %460 = vmatpush1.msra.mxu0 0.0
  %461 = vmatprep.subr.mxu0 0.0
  %462 = vmatpush1.msra.mxu0 0.0
  %463 = vmatprep.subr.mxu0 0.0
  %464 = vmatpush1.msra.mxu0 0.0
  %465 = vmatprep.subr.mxu0 0.0
  %466 = vmatpush1.msra.mxu0 0.0
  %467 = vmatprep.subr.mxu0 0.0
  %468 = vmatpush1.msra.mxu0 0.0
  %469 = vmatprep.subr.mxu0 0.0
  %470 = vmatpush1.msra.mxu0 %v404
  %471 = vmatprep.subr.mxu0 0.0
  %472 = vmatpush1.msra.mxu0 %v403
  %473 = vmatprep.subr.mxu0 0.0
  %474 = vmatpush1.msra.mxu0 %v402
  %475 = vmatprep.subr.mxu0 0.0
  %476 = vmatpush1.msra.mxu0 %v401
  %477 = vmatprep.subr.mxu0 0.0
  %478 = vmatpush2.msra.mxu0 0.0
  %479 = vmatprep.subr.mxu0 0.0
  %480 = vmatpush2.msra.mxu0 0.0
  %481 = vmatprep.subr.mxu0 0.0
  %482 = vmatpush2.msra.mxu0 0.0
  %483 = vmatprep.subr.mxu0 0.0
  %484 = vmatpush2.msra.mxu0 0.0
  %485 = vmatprep.subr.mxu0 0.0
  %486 = vmatpush2.msra.mxu0 0.0
  %487 = vmatprep.subr.mxu0 0.0
  %488 = vmatpush2.msra.mxu0 0.0
  %489 = vmatprep.subr.mxu0 0.0
  %490 = vmatpush2.msra.mxu0 0.0
  %491 = vmatprep.subr.mxu0 0.0
  %492 = vmatpush2.msra.mxu0 0.0
  %493 = vmatprep.subr.mxu0 0.0
  %494 = vmatpush2.msra.mxu0 0.0
  %495 = vmatprep.subr.mxu0 0.0
  %496 = vmatpush2.msra.mxu0 0.0
  %497 = vmatprep.subr.mxu0 0.0
  %498 = vmatpush2.msra.mxu0 0.0
  %499 = vmatprep.subr.mxu0 0.0
  %500 = vmatpush2.msra.mxu0 0.0
  %501 = vmatprep.subr.mxu0 0.0
  %502 = vmatpush2.msra.mxu0 0.0
  %503 = vmatprep.subr.mxu0 0.0
  %504 = vmatpush2.msra.mxu0 0.0
  %505 = vmatprep.subr.mxu0 0.0
  %506 = vmatpush2.msra.mxu0 0.0
  %507 = vmatprep.subr.mxu0 0.0
  %508 = vmatpush2.msra.mxu0 0.0
  %509 = vmatprep.mubr.f32.mxu0 0.0
  %510 = vmatmul.mubr.f32.gmra.mxu0 %v434
  %v511 = vpop.f32.mrf.mxu0
  %v512 = vadd.f32 %v416, %v511
  %v513 = vpop.f32.mrf.mxu0
  %514 = vmatprep.mubr.f32.mxu0 0.0
  %515 = vmatmul.mubr.f32.gmra.mxu0 %v437
  %v516 = vpop.f32.mrf.mxu0
  %v517 = vadd.f32 %v421, %v516
  %v518 = vpop.f32.mrf.mxu0
  %519 = vmatprep.mubr.f32.mxu0 0.0
  %520 = vmatmul.mubr.f32.gmra.mxu0 %v440
  %v521 = vpop.f32.mrf.mxu0
  %v522 = vadd.f32 %v426, %v521
  %v523 = vpop.f32.mrf.mxu0
  %524 = vmatprep.mubr.f32.mxu0 0.0
  %525 = vmatmul.mubr.f32.gmra.mxu0 %v443
  %v526 = vpop.f32.mrf.mxu0
  %v527 = vadd.f32 %v431, %v526
  %v528 = vpop.f32.mrf.mxu0
  %529 = vdwg.mxu0
  %v530 = vtanh.pop %v512
  %v531 = vtanh.pop %v517
  %v532 = vtanh.pop %v522
  %v533 = vtanh.pop %v527
  %v534 = vld [vmem:[%s1 + $0x80] sm:$0xff]
  %v535 = vld [vmem:[%s1 + $0x88] sm:$0xff]
  %v536 = vld [vmem:[%s1 + $0x90] sm:$0xff]
  %v537 = vld [vmem:[%s1 + $0x98] sm:$0xff]
  %v538 = vld [vmem:[%s2 + $0x80] sm:$0xff]
  %v539 = vld [vmem:[%s2 + $0x88] sm:$0xff]
  %v540 = vld [vmem:[%s2 + $0x90] sm:$0xff]
  %v541 = vld [vmem:[%s2 + $0x98] sm:$0xff]
  %543 = vset.pattern.permute.xlu0 0
  %544 = vperm.xlu0 %543, %v538
  %v545 = vpop.permute.xlu0 %544
  %548 = vset.pattern.permute.xlu0 0
  %549 = vperm.xlu0 %548, %v539
  %v550 = vpop.permute.xlu0 %549
  %553 = vset.pattern.permute.xlu0 0
  %554 = vperm.xlu0 %553, %v540
  %v555 = vpop.permute.xlu0 %554
  %558 = vset.pattern.permute.xlu0 0
  %559 = vperm.xlu0 %558, %v541
  %v560 = vpop.permute.xlu0 %559
  %v563 = vsel %vm174, %v534, 0
  %v566 = vsel %vm174, %v535, 0
  %v569 = vsel %vm174, %v536, 0
  %v572 = vsel %vm174, %v537, 0
  %574 = vmatprep.subr.mxu0 0.0
  %575 = vmatpush1.msra.mxu0 0.0
  %576 = vmatprep.subr.mxu0 0.0
  %577 = vmatpush1.msra.mxu0 0.0
  %578 = vmatprep.subr.mxu0 0.0
  %579 = vmatpush1.msra.mxu0 0.0
  %580 = vmatprep.subr.mxu0 0.0
  %581 = vmatpush1.msra.mxu0 0.0
  %582 = vmatprep.subr.mxu0 0.0
  %583 = vmatpush1.msra.mxu0 0.0
  %584 = vmatprep.subr.mxu0 0.0
  %585 = vmatpush1.msra.mxu0 0.0
  %586 = vmatprep.subr.mxu0 0.0
  %587 = vmatpush1.msra.mxu0 0.0
  %588 = vmatprep.subr.mxu0 0.0
  %589 = vmatpush1.msra.mxu0 0.0
  %590 = vmatprep.subr.mxu0 0.0
  %591 = vmatpush1.msra.mxu0 0.0
  %592 = vmatprep.subr.mxu0 0.0
  %593 = vmatpush1.msra.mxu0 0.0
  %594 = vmatprep.subr.mxu0 0.0
  %595 = vmatpush1.msra.mxu0 0.0
  %596 = vmatprep.subr.mxu0 0.0
  %597 = vmatpush1.msra.mxu0 0.0
  %598 = vmatprep.subr.mxu0 0.0
  %599 = vmatpush1.msra.mxu0 %v533
  %600 = vmatprep.subr.mxu0 0.0
  %601 = vmatpush1.msra.mxu0 %v532
  %602 = vmatprep.subr.mxu0 0.0
  %603 = vmatpush1.msra.mxu0 %v531
  %604 = vmatprep.subr.mxu0 0.0
  %605 = vmatpush1.msra.mxu0 %v530
  %606 = vmatprep.subr.mxu0 0.0
  %607 = vmatpush2.msra.mxu0 0.0
  %608 = vmatprep.subr.mxu0 0.0
  %609 = vmatpush2.msra.mxu0 0.0
  %610 = vmatprep.subr.mxu0 0.0
  %611 = vmatpush2.msra.mxu0 0.0
  %612 = vmatprep.subr.mxu0 0.0
  %613 = vmatpush2.msra.mxu0 0.0
  %614 = vmatprep.subr.mxu0 0.0
  %615 = vmatpush2.msra.mxu0 0.0
  %616 = vmatprep.subr.mxu0 0.0
  %617 = vmatpush2.msra.mxu0 0.0
  %618 = vmatprep.subr.mxu0 0.0
  %619 = vmatpush2.msra.mxu0 0.0
  %620 = vmatprep.subr.mxu0 0.0
  %621 = vmatpush2.msra.mxu0 0.0
  %622 = vmatprep.subr.mxu0 0.0
  %623 = vmatpush2.msra.mxu0 0.0
  %624 = vmatprep.subr.mxu0 0.0
  %625 = vmatpush2.msra.mxu0 0.0
  %626 = vmatprep.subr.mxu0 0.0
  %627 = vmatpush2.msra.mxu0 0.0
  %628 = vmatprep.subr.mxu0 0.0
  %629 = vmatpush2.msra.mxu0 0.0
  %630 = vmatprep.subr.mxu0 0.0
  %631 = vmatpush2.msra.mxu0 0.0
  %632 = vmatprep.subr.mxu0 0.0
  %633 = vmatpush2.msra.mxu0 0.0
  %634 = vmatprep.subr.mxu0 0.0
  %635 = vmatpush2.msra.mxu0 0.0
  %636 = vmatprep.subr.mxu0 0.0
  %637 = vmatpush2.msra.mxu0 0.0
  %638 = vmatprep.mubr.f32.mxu0 0.0
  %639 = vmatmul.mubr.f32.gmra.mxu0 %v563
  %v640 = vpop.f32.mrf.mxu0
  %v641 = vadd.f32 %v545, %v640
  %v642 = vpop.f32.mrf.mxu0
  %643 = vmatprep.mubr.f32.mxu0 0.0
  %644 = vmatmul.mubr.f32.gmra.mxu0 %v566
  %v645 = vpop.f32.mrf.mxu0
  %v646 = vadd.f32 %v550, %v645
  %v647 = vpop.f32.mrf.mxu0
  %648 = vmatprep.mubr.f32.mxu0 0.0
  %649 = vmatmul.mubr.f32.gmra.mxu0 %v569
  %v650 = vpop.f32.mrf.mxu0
  %v651 = vadd.f32 %v555, %v650
  %v652 = vpop.f32.mrf.mxu0
  %653 = vmatprep.mubr.f32.mxu0 0.0
  %654 = vmatmul.mubr.f32.gmra.mxu0 %v572
  %v655 = vpop.f32.mrf.mxu0
  %v656 = vadd.f32 %v560, %v655
  %v657 = vpop.f32.mrf.mxu0
  %658 = vdwg.mxu0
  %v659 = vtanh.pop %v641
  %v660 = vtanh.pop %v646
  %v661 = vtanh.pop %v651
  %v662 = vtanh.pop %v656
  %v663 = vld [vmem:[%s1 + $0xa0] sm:$0xff]
  %v664 = vld [vmem:[%s1 + $0xa8] sm:$0xff]
  %v665 = vld [vmem:[%s1 + $0xb0] sm:$0xff]
  %v666 = vld [vmem:[%s1 + $0xb8] sm:$0xff]
  %v667 = vld [vmem:[%s2 + $0xa0] sm:$0xff]
  %v668 = vld [vmem:[%s2 + $0xa8] sm:$0xff]
  %v669 = vld [vmem:[%s2 + $0xb0] sm:$0xff]
  %v670 = vld [vmem:[%s2 + $0xb8] sm:$0xff]
  %672 = vset.pattern.permute.xlu0 0
  %673 = vperm.xlu0 %672, %v667
  %v674 = vpop.permute.xlu0 %673
  %677 = vset.pattern.permute.xlu0 0
  %678 = vperm.xlu0 %677, %v668
  %v679 = vpop.permute.xlu0 %678
  %682 = vset.pattern.permute.xlu0 0
  %683 = vperm.xlu0 %682, %v669
  %v684 = vpop.permute.xlu0 %683
  %687 = vset.pattern.permute.xlu0 0
  %688 = vperm.xlu0 %687, %v670
  %v689 = vpop.permute.xlu0 %688
  %v692 = vsel %vm174, %v663, 0
  %v695 = vsel %vm174, %v664, 0
  %v698 = vsel %vm174, %v665, 0
  %v701 = vsel %vm174, %v666, 0
  %703 = vmatprep.subr.mxu0 0.0
  %704 = vmatpush1.msra.mxu0 0.0
  %705 = vmatprep.subr.mxu0 0.0
  %706 = vmatpush1.msra.mxu0 0.0
  %707 = vmatprep.subr.mxu0 0.0
  %708 = vmatpush1.msra.mxu0 0.0
  %709 = vmatprep.subr.mxu0 0.0
  %710 = vmatpush1.msra.mxu0 0.0
  %711 = vmatprep.subr.mxu0 0.0
  %712 = vmatpush1.msra.mxu0 0.0
  %713 = vmatprep.subr.mxu0 0.0
  %714 = vmatpush1.msra.mxu0 0.0
  %715 = vmatprep.subr.mxu0 0.0
  %716 = vmatpush1.msra.mxu0 0.0
  %717 = vmatprep.subr.mxu0 0.0
  %718 = vmatpush1.msra.mxu0 0.0
  %719 = vmatprep.subr.mxu0 0.0
  %720 = vmatpush1.msra.mxu0 0.0
  %721 = vmatprep.subr.mxu0 0.0
  %722 = vmatpush1.msra.mxu0 0.0
  %723 = vmatprep.subr.mxu0 0.0
  %724 = vmatpush1.msra.mxu0 0.0
  %725 = vmatprep.subr.mxu0 0.0
  %726 = vmatpush1.msra.mxu0 0.0
  %727 = vmatprep.subr.mxu0 0.0
  %728 = vmatpush1.msra.mxu0 %v662
  %729 = vmatprep.subr.mxu0 0.0
  %730 = vmatpush1.msra.mxu0 %v661
  %731 = vmatprep.subr.mxu0 0.0
  %732 = vmatpush1.msra.mxu0 %v660
  %733 = vmatprep.subr.mxu0 0.0
  %734 = vmatpush1.msra.mxu0 %v659
  %735 = vmatprep.subr.mxu0 0.0
  %736 = vmatpush2.msra.mxu0 0.0
  %737 = vmatprep.subr.mxu0 0.0
  %738 = vmatpush2.msra.mxu0 0.0
  %739 = vmatprep.subr.mxu0 0.0
  %740 = vmatpush2.msra.mxu0 0.0
  %741 = vmatprep.subr.mxu0 0.0
  %742 = vmatpush2.msra.mxu0 0.0
  %743 = vmatprep.subr.mxu0 0.0
  %744 = vmatpush2.msra.mxu0 0.0
  %745 = vmatprep.subr.mxu0 0.0
  %746 = vmatpush2.msra.mxu0 0.0
  %747 = vmatprep.subr.mxu0 0.0
  %748 = vmatpush2.msra.mxu0 0.0
  %749 = vmatprep.subr.mxu0 0.0
  %750 = vmatpush2.msra.mxu0 0.0
  %751 = vmatprep.subr.mxu0 0.0
  %752 = vmatpush2.msra.mxu0 0.0
  %753 = vmatprep.subr.mxu0 0.0
  %754 = vmatpush2.msra.mxu0 0.0
  %755 = vmatprep.subr.mxu0 0.0
  %756 = vmatpush2.msra.mxu0 0.0
  %757 = vmatprep.subr.mxu0 0.0
  %758 = vmatpush2.msra.mxu0 0.0
  %759 = vmatprep.subr.mxu0 0.0
  %760 = vmatpush2.msra.mxu0 0.0
  %761 = vmatprep.subr.mxu0 0.0
  %762 = vmatpush2.msra.mxu0 0.0
  %763 = vmatprep.subr.mxu0 0.0
  %764 = vmatpush2.msra.mxu0 0.0
  %765 = vmatprep.subr.mxu0 0.0
  %766 = vmatpush2.msra.mxu0 0.0
  %767 = vmatprep.mubr.f32.mxu0 0.0
  %768 = vmatmul.mubr.f32.gmra.mxu0 %v692
  %v769 = vpop.f32.mrf.mxu0
  %v770 = vadd.f32 %v674, %v769
  %v771 = vpop.f32.mrf.mxu0
  %772 = vmatprep.mubr.f32.mxu0 0.0
  %773 = vmatmul.mubr.f32.gmra.mxu0 %v695
  %v774 = vpop.f32.mrf.mxu0
  %v775 = vadd.f32 %v679, %v774
  %v776 = vpop.f32.mrf.mxu0
  %777 = vmatprep.mubr.f32.mxu0 0.0
  %778 = vmatmul.mubr.f32.gmra.mxu0 %v698
  %v779 = vpop.f32.mrf.mxu0
  %v780 = vadd.f32 %v684, %v779
  %v781 = vpop.f32.mrf.mxu0
  %782 = vmatprep.mubr.f32.mxu0 0.0
  %783 = vmatmul.mubr.f32.gmra.mxu0 %v701
  %v784 = vpop.f32.mrf.mxu0
  %v785 = vadd.f32 %v689, %v784
  %v786 = vpop.f32.mrf.mxu0
  %787 = vdwg.mxu0
  %v788 = vtanh.pop %v770
  %v789 = vtanh.pop %v775
  %v790 = vtanh.pop %v780
  %v791 = vtanh.pop %v785
  %v792 = vld [vmem:[%s1 + $0xc0] sm:$0xff]
  %v793 = vld [vmem:[%s1 + $0xc8] sm:$0xff]
  %v794 = vld [vmem:[%s1 + $0xd0] sm:$0xff]
  %v795 = vld [vmem:[%s2 + $0xc0] sm:$0xff]
  %v796 = vld [vmem:[%s2 + $0xc8] sm:$0xff]
  %v797 = vld [vmem:[%s2 + $0xd0] sm:$0xff]
  %799 = vset.pattern.permute.xlu0 0
  %800 = vperm.xlu0 %799, %v795
  %v801 = vpop.permute.xlu0 %800
  %804 = vset.pattern.permute.xlu0 0
  %805 = vperm.xlu0 %804, %v796
  %v806 = vpop.permute.xlu0 %805
  %809 = vset.pattern.permute.xlu0 0
  %810 = vperm.xlu0 %809, %v797
  %v811 = vpop.permute.xlu0 %810
  %v814 = vsel %vm174, %v792, 0
  %v817 = vsel %vm174, %v793, 0
  %v820 = vsel %vm174, %v794, 0
  %822 = vmatprep.subr.mxu0 0.0
  %823 = vmatpush1.msra.mxu0 0.0
  %824 = vmatprep.subr.mxu0 0.0
  %825 = vmatpush1.msra.mxu0 0.0
  %826 = vmatprep.subr.mxu0 0.0
  %827 = vmatpush1.msra.mxu0 0.0
  %828 = vmatprep.subr.mxu0 0.0
  %829 = vmatpush1.msra.mxu0 0.0
  %830 = vmatprep.subr.mxu0 0.0
  %831 = vmatpush1.msra.mxu0 0.0
  %832 = vmatprep.subr.mxu0 0.0
  %833 = vmatpush1.msra.mxu0 0.0
  %834 = vmatprep.subr.mxu0 0.0
  %835 = vmatpush1.msra.mxu0 0.0
  %836 = vmatprep.subr.mxu0 0.0
  %837 = vmatpush1.msra.mxu0 0.0
  %838 = vmatprep.subr.mxu0 0.0
  %839 = vmatpush1.msra.mxu0 0.0
  %840 = vmatprep.subr.mxu0 0.0
  %841 = vmatpush1.msra.mxu0 0.0
  %842 = vmatprep.subr.mxu0 0.0
  %843 = vmatpush1.msra.mxu0 0.0
  %844 = vmatprep.subr.mxu0 0.0
  %845 = vmatpush1.msra.mxu0 0.0
  %846 = vmatprep.subr.mxu0 0.0
  %847 = vmatpush1.msra.mxu0 %v791
  %848 = vmatprep.subr.mxu0 0.0
  %849 = vmatpush1.msra.mxu0 %v790
  %850 = vmatprep.subr.mxu0 0.0
  %851 = vmatpush1.msra.mxu0 %v789
  %852 = vmatprep.subr.mxu0 0.0
  %853 = vmatpush1.msra.mxu0 %v788
  %854 = vmatprep.subr.mxu0 0.0
  %855 = vmatpush2.msra.mxu0 0.0
  %856 = vmatprep.subr.mxu0 0.0
  %857 = vmatpush2.msra.mxu0 0.0
  %858 = vmatprep.subr.mxu0 0.0
  %859 = vmatpush2.msra.mxu0 0.0
  %860 = vmatprep.subr.mxu0 0.0
  %861 = vmatpush2.msra.mxu0 0.0
  %862 = vmatprep.subr.mxu0 0.0
  %863 = vmatpush2.msra.mxu0 0.0
  %864 = vmatprep.subr.mxu0 0.0
  %865 = vmatpush2.msra.mxu0 0.0
  %866 = vmatprep.subr.mxu0 0.0
  %867 = vmatpush2.msra.mxu0 0.0
  %868 = vmatprep.subr.mxu0 0.0
  %869 = vmatpush2.msra.mxu0 0.0
  %870 = vmatprep.subr.mxu0 0.0
  %871 = vmatpush2.msra.mxu0 0.0
  %872 = vmatprep.subr.mxu0 0.0
  %873 = vmatpush2.msra.mxu0 0.0
  %874 = vmatprep.subr.mxu0 0.0
  %875 = vmatpush2.msra.mxu0 0.0
  %876 = vmatprep.subr.mxu0 0.0
  %877 = vmatpush2.msra.mxu0 0.0
  %878 = vmatprep.subr.mxu0 0.0
  %879 = vmatpush2.msra.mxu0 0.0
  %880 = vmatprep.subr.mxu0 0.0
  %881 = vmatpush2.msra.mxu0 0.0
  %882 = vmatprep.subr.mxu0 0.0
  %883 = vmatpush2.msra.mxu0 0.0
  %884 = vmatprep.subr.mxu0 0.0
  %885 = vmatpush2.msra.mxu0 0.0
  %886 = vmatprep.mubr.f32.mxu0 0.0
  %887 = vmatmul.mubr.f32.gmra.mxu0 %v814
  %v888 = vpop.f32.mrf.mxu0
  %v889 = vadd.f32 %v801, %v888
  %v890 = vpop.f32.mrf.mxu0
  %891 = vmatprep.mubr.f32.mxu0 0.0
  %892 = vmatmul.mubr.f32.gmra.mxu0 %v817
  %v893 = vpop.f32.mrf.mxu0
  %v894 = vadd.f32 %v806, %v893
  %v895 = vpop.f32.mrf.mxu0
  %896 = vmatprep.mubr.f32.mxu0 0.0
  %897 = vmatmul.mubr.f32.gmra.mxu0 %v820
  %v898 = vpop.f32.mrf.mxu0
  %v899 = vadd.f32 %v811, %v898
  %v900 = vpop.f32.mrf.mxu0
  %901 = vdwg.mxu0
  %902 = vst [vmem:[%s3] sm:$0xff] %v889
  %903 = vst [vmem:[%s3 + $0x8] sm:$0xff] %v894
  %904 = vst [vmem:[%s3 + $0x10] sm:$0xff] %v899
  // Predicated region
  $region14: #{lift_net_forward.1} parent=0 // pred_check
    _
  $region15: #{lift_net_forward.1} parent=0 // pred_check_branch
    %906 = sbr.rel (0) target = $region17
  $region16: #{lift_net_forward.1} parent=0 // pred_region
    _
  $region17: #{lift_net_forward.1} parent=0 // pred_fallthru
    _
  // Predicated region
  $region18: #{lift_net_forward.1} parent=0 // pred_check
    _
  $region19: #{lift_net_forward.1} parent=0 // pred_check_branch
    %908 = sbr.rel (0) target = $region21
  $region20: #{lift_net_forward.1} parent=0 // pred_region
    _
  $region21: #{lift_net_forward.1} parent=0 // pred_fallthru
    _

</llo_original>
